<compile_context>
chip_gen: v5e
topology: v5e:2x2
jax: 0.10.0
libtpu: 0.0.40
codegen_flags: <defaults>
</compile_context>

<pallas_src>
import math

import jax
import jax.numpy as jnp
from jax.experimental import pallas as pl
from jax.experimental.pallas import tpu as pltpu

K_IN = 28 * 28     # 784
H1 = 128
H2 = 64
N_OUT = 32


def _round_up(x, m):
    return (x + m - 1) // m * m


def _cdiv(a, b):
    return -(-a // b)


def mlp_kernel(x_ref, w1_ref, b1_ref, w2_ref, b2_ref, w3_ref, b3_ref, o_ref):
    # bf16 MXU operands, f32 accumulation; f32 bias-add / ReLU epilogues.
    x = x_ref[...].astype(jnp.bfloat16)                               # (TB, 784)
    h1 = jnp.dot(x, w1_ref[...], preferred_element_type=jnp.float32)
    h1 = jnp.maximum(h1 + b1_ref[...], 0.0)                           # (TB, 128) f32
    h2 = jnp.dot(h1.astype(jnp.bfloat16), w2_ref[...],
                 preferred_element_type=jnp.float32)
    h2 = jnp.maximum(h2 + b2_ref[...], 0.0)                           # (TB, 64)  f32
    h3 = jnp.dot(h2.astype(jnp.bfloat16), w3_ref[...],
                 preferred_element_type=jnp.float32)
    o_ref[...] = (h3 + b3_ref[...]).astype(o_ref.dtype)               # (TB, 32)  f32


def _choose_batch_tile(batch, max_tile):
    # Tiny batch: one full-extent block (block dim == array dim is always legal).
    if batch <= 16:
        return batch
    # Otherwise: >= 2 grid steps (keeps both v7x TensorCores busy via the
    # "parallel" batch axis), tiles capped at max_tile, sublane-rounded so the
    # partial last block wastes at most a handful of rows.
    n_steps = max(2, _cdiv(batch, max_tile))
    return _round_up(_cdiv(batch, n_steps), 8)


def prepare_params(params):
    """One-time cast/layout of fc1..fc3 params for the kernel (call once, reuse)."""
    w1, b1, w2, b2, w3, b3 = params
    return (w1.astype(jnp.bfloat16), b1.astype(jnp.float32),
            w2.astype(jnp.bfloat16), b2.astype(jnp.float32),
            w3.astype(jnp.bfloat16), b3.astype(jnp.float32))


def simple_nn_forward(x_nchw, prepared_params, *, max_batch_tile=2048):
    """Pallas forward for SimpleNN. x_nchw: [B, 1, 28, 28]. Returns [B, 32] f32."""
    w1, b1, w2, b2, w3, b3 = prepared_params   # weights bf16 [in, out], biases f32
    batch = x_nchw.shape[0]
    x = x_nchw.reshape(batch, K_IN).astype(jnp.float32)   # metadata-only reshape

    tb = _choose_batch_tile(batch, max_batch_tile)
    grid = (_cdiv(batch, tb),)

    # VMEM budget: double-buffered streamed tiles + in-kernel intermediates
    # + resident weights/biases, with headroom for the compiler.
    per_row_stream = K_IN * 4 + N_OUT * 4                 # f32 x tile + f32 out tile
    per_row_interm = (K_IN * 2                            # x bf16 recast
                      + H1 * (4 + 2)                      # h1 f32 + bf16 recast
                      + H2 * (4 + 2)                      # h2 f32 + bf16 recast
                      + N_OUT * 4)                        # h3 f32
    weights_bytes = ((K_IN * H1 + H1 * H2 + H2 * N_OUT) * 2
                     + (H1 + H2 + N_OUT) * 4)
    vmem_bytes = 2 * tb * per_row_stream + tb * per_row_interm + weights_bytes
    vmem_limit = min(int(vmem_bytes * 1.5) + (4 << 20), 64 << 20)

    flops = 2 * batch * (K_IN * H1 + H1 * H2 + H2 * N_OUT)
    bytes_accessed = (batch * K_IN * 4                    # x (f32, streamed once)
                      + weights_bytes                     # resident params
                      + batch * N_OUT * 4)                # output (f32)

    def const(shape):
        return pl.BlockSpec(shape, lambda i: (0, 0))

    out = pl.pallas_call(
        mlp_kernel,
        out_shape=jax.ShapeDtypeStruct((batch, N_OUT), jnp.float32),
        grid=grid,
        in_specs=[
            pl.BlockSpec((tb, K_IN), lambda i: (i, 0)),   # x streams over batch
            const((K_IN, H1)), const((1, H1)),            # fc1 (VMEM-resident)
            const((H1, H2)),   const((1, H2)),            # fc2
            const((H2, N_OUT)), const((1, N_OUT)),        # fc3
        ],
        out_specs=pl.BlockSpec((tb, N_OUT), lambda i: (i, 0)),
        compiler_params=pltpu.CompilerParams(
            dimension_semantics=("parallel",),
            vmem_limit_bytes=vmem_limit,
        ),
        cost_estimate=pl.CostEstimate(
            flops=flops, transcendentals=0, bytes_accessed=bytes_accessed),
    )(x, w1, b1, w2, b2, w3, b3)

    return out


def init_params(key):
    """Deterministic init mimicking PyTorch nn.Linear (uniform +/- 1/sqrt(fan_in)).
    Weights stored as [in, out] (transposed from nn.Linear's [out, in])."""
    dims = [(K_IN, H1), (H1, H2), (H2, N_OUT)]
    params = []
    for fan_in, fan_out in dims:
        kw, kb, key = jax.random.split(key, 3)
        bound = 1.0 / math.sqrt(fan_in)
        w = jax.random.uniform(kw, (fan_in, fan_out), jnp.float32, -bound, bound)
        b = jax.random.uniform(kb, (1, fan_out), jnp.float32, -bound, bound)
        params.extend([w, b])
    return tuple(params)


def reference_forward(x_nchw, params):
    w1, b1, w2, b2, w3, b3 = params
    x = x_nchw.reshape(x_nchw.shape[0], K_IN)
    h1 = jnp.maximum(x @ w1 + b1, 0.0)
    h2 = jnp.maximum(h1 @ w2 + b2, 0.0)
    return h2 @ w3 + b3


if __name__ == "__main__":
    key = jax.random.PRNGKey(0)
    k_x, k_p = jax.random.split(key)

    batch = 8
    x = jax.random.normal(k_x, (batch, 1, 28, 28), jnp.float32)  # NCHW MNIST-like
    params = init_params(k_p)
    prepared = prepare_params(params)   # one-time cast, reused across calls

    out = simple_nn_forward(x, prepared)
    out = jax.block_until_ready(out)

    ref = reference_forward(x, params)
    assert out.shape == (batch, N_OUT)
    # bf16 matmul operands with f32 accumulation -> loosened tolerance vs f32 ref.
    assert jnp.allclose(out, ref, atol=5e-2, rtol=5e-2)

    print("KERNEL_OK")
</pallas_src>

<mosaic_0001>
module attributes {stable_mosaic.version = 11 : i64} {
  func.func @mlp_kernel(%arg0: i32, %arg1: memref<8x784xf32, #tpu.memory_space<vmem>>, %arg2: memref<784x128xbf16, #tpu.memory_space<vmem>>, %arg3: memref<1x128xf32, #tpu.memory_space<vmem>>, %arg4: memref<128x64xbf16, #tpu.memory_space<vmem>>, %arg5: memref<1x64xf32, #tpu.memory_space<vmem>>, %arg6: memref<64x32xbf16, #tpu.memory_space<vmem>>, %arg7: memref<1x32xf32, #tpu.memory_space<vmem>>, %arg8: memref<8x32xf32, #tpu.memory_space<vmem>>) attributes {dimension_semantics = [#tpu.dimension_semantics<parallel>], iteration_bounds = array<i64: 1>, scalar_prefetch = 0 : i64, scratch_operands = 0 : i64, tpu.core_type = #tpu.core_type<tc>, window_params = [{transform_indices = @transform_0, window_bounds = array<i64: 8, 784>}, {pipeline_mode = #tpu.pipeline_mode<synchronous>, transform_indices = @transform_1, window_bounds = array<i64: 784, 128>}, {pipeline_mode = #tpu.pipeline_mode<synchronous>, transform_indices = @transform_2, window_bounds = array<i64: 1, 128>}, {pipeline_mode = #tpu.pipeline_mode<synchronous>, transform_indices = @transform_3, window_bounds = array<i64: 128, 64>}, {pipeline_mode = #tpu.pipeline_mode<synchronous>, transform_indices = @transform_4, window_bounds = array<i64: 1, 64>}, {pipeline_mode = #tpu.pipeline_mode<synchronous>, transform_indices = @transform_5, window_bounds = array<i64: 64, 32>}, {pipeline_mode = #tpu.pipeline_mode<synchronous>, transform_indices = @transform_6, window_bounds = array<i64: 1, 32>}, {transform_indices = @transform_7, window_bounds = array<i64: 8, 32>}]} {
    %c0 = arith.constant 0 : index
    %c0_0 = arith.constant 0 : index
    %0 = vector.load %arg1[%c0, %c0_0] : memref<8x784xf32, #tpu.memory_space<vmem>>, vector<8x784xf32>
    %1 = arith.truncf %0 : vector<8x784xf32> to vector<8x784xbf16>
    %c0_1 = arith.constant 0 : index
    %c0_2 = arith.constant 0 : index
    %2 = vector.load %arg2[%c0_1, %c0_2] : memref<784x128xbf16, #tpu.memory_space<vmem>>, vector<784x128xbf16>
    %cst = arith.constant dense<0.000000e+00> : vector<8x128xf32>
    %3 = tpu.matmul %1, %2, %cst {dimension_numbers = #tpu.dot_dimension_numbers<[1], [0], [0], [1], [0, 0, 1, 1], [], []>} : vector<8x784xbf16>, vector<784x128xbf16>, vector<8x128xf32> -> vector<8x128xf32>
    %c0_3 = arith.constant 0 : index
    %c0_4 = arith.constant 0 : index
    %4 = vector.load %arg3[%c0_3, %c0_4] : memref<1x128xf32, #tpu.memory_space<vmem>>, vector<1x128xf32>
    %5 = vector.broadcast %4 : vector<1x128xf32> to vector<8x128xf32>
    %6 = arith.addf %3, %5 : vector<8x128xf32>
    %cst_5 = arith.constant 0.000000e+00 : f32
    %7 = vector.broadcast %cst_5 : f32 to vector<8x128xf32>
    %8 = arith.maximumf %6, %7 : vector<8x128xf32>
    %9 = arith.truncf %8 : vector<8x128xf32> to vector<8x128xbf16>
    %c0_6 = arith.constant 0 : index
    %c0_7 = arith.constant 0 : index
    %10 = vector.load %arg4[%c0_6, %c0_7] : memref<128x64xbf16, #tpu.memory_space<vmem>>, vector<128x64xbf16>
    %cst_8 = arith.constant dense<0.000000e+00> : vector<8x64xf32>
    %11 = tpu.matmul %9, %10, %cst_8 {dimension_numbers = #tpu.dot_dimension_numbers<[1], [0], [0], [1], [0, 0, 1, 1], [], []>} : vector<8x128xbf16>, vector<128x64xbf16>, vector<8x64xf32> -> vector<8x64xf32>
    %c0_9 = arith.constant 0 : index
    %c0_10 = arith.constant 0 : index
    %12 = vector.load %arg5[%c0_9, %c0_10] : memref<1x64xf32, #tpu.memory_space<vmem>>, vector<1x64xf32>
    %13 = vector.broadcast %12 : vector<1x64xf32> to vector<8x64xf32>
    %14 = arith.addf %11, %13 : vector<8x64xf32>
    %cst_11 = arith.constant 0.000000e+00 : f32
    %15 = vector.broadcast %cst_11 : f32 to vector<8x64xf32>
    %16 = arith.maximumf %14, %15 : vector<8x64xf32>
    %17 = arith.truncf %16 : vector<8x64xf32> to vector<8x64xbf16>
    %c0_12 = arith.constant 0 : index
    %c0_13 = arith.constant 0 : index
    %18 = vector.load %arg6[%c0_12, %c0_13] : memref<64x32xbf16, #tpu.memory_space<vmem>>, vector<64x32xbf16>
    %cst_14 = arith.constant dense<0.000000e+00> : vector<8x32xf32>
    %19 = tpu.matmul %17, %18, %cst_14 {dimension_numbers = #tpu.dot_dimension_numbers<[1], [0], [0], [1], [0, 0, 1, 1], [], []>} : vector<8x64xbf16>, vector<64x32xbf16>, vector<8x32xf32> -> vector<8x32xf32>
    %c0_15 = arith.constant 0 : index
    %c0_16 = arith.constant 0 : index
    %20 = vector.load %arg7[%c0_15, %c0_16] : memref<1x32xf32, #tpu.memory_space<vmem>>, vector<1x32xf32>
    %21 = vector.broadcast %20 : vector<1x32xf32> to vector<8x32xf32>
    %22 = arith.addf %19, %21 : vector<8x32xf32>
    %c0_17 = arith.constant 0 : index
    %c0_18 = arith.constant 0 : index
    %23 = vector.load %arg8[%c0_17, %c0_18] : memref<8x32xf32, #tpu.memory_space<vmem>>, vector<8x32xf32>
    tpu.vector_store %arg8[%c0_17, %c0_18], %22 {strides = array<i32>} : memref<8x32xf32, #tpu.memory_space<vmem>>, vector<8x32xf32>,
    return
  }
  func.func @transform_0(%arg0: i32) -> (i32, i32) {
    %c0_i32 = arith.constant 0 : i32
    %c0_i32_0 = arith.constant 0 : i32
    return %arg0, %c0_i32 : i32, i32
  }
  func.func @transform_1(%arg0: i32) -> (i32, i32) {
    %c0_i32 = arith.constant 0 : i32
    %c0_i32_0 = arith.constant 0 : i32
    %c0_i32_1 = arith.constant 0 : i32
    return %c0_i32, %c0_i32_0 : i32, i32
  }
  func.func @transform_2(%arg0: i32) -> (i32, i32) {
    %c0_i32 = arith.constant 0 : i32
    %c0_i32_0 = arith.constant 0 : i32
    %c0_i32_1 = arith.constant 0 : i32
    return %c0_i32, %c0_i32_0 : i32, i32
  }
  func.func @transform_3(%arg0: i32) -> (i32, i32) {
    %c0_i32 = arith.constant 0 : i32
    %c0_i32_0 = arith.constant 0 : i32
    %c0_i32_1 = arith.constant 0 : i32
    return %c0_i32, %c0_i32_0 : i32, i32
  }
  func.func @transform_4(%arg0: i32) -> (i32, i32) {
    %c0_i32 = arith.constant 0 : i32
    %c0_i32_0 = arith.constant 0 : i32
    %c0_i32_1 = arith.constant 0 : i32
    return %c0_i32, %c0_i32_0 : i32, i32
  }
  func.func @transform_5(%arg0: i32) -> (i32, i32) {
    %c0_i32 = arith.constant 0 : i32
    %c0_i32_0 = arith.constant 0 : i32
    %c0_i32_1 = arith.constant 0 : i32
    return %c0_i32, %c0_i32_0 : i32, i32
  }
  func.func @transform_6(%arg0: i32) -> (i32, i32) {
    %c0_i32 = arith.constant 0 : i32
    %c0_i32_0 = arith.constant 0 : i32
    %c0_i32_1 = arith.constant 0 : i32
    return %c0_i32, %c0_i32_0 : i32, i32
  }
  func.func @transform_7(%arg0: i32) -> (i32, i32) {
    %c0_i32 = arith.constant 0 : i32
    %c0_i32_0 = arith.constant 0 : i32
    return %arg0, %c0_i32 : i32, i32
  }
}

</mosaic_0001>

<llo_original>
// kernel: tpu_custom_call.1
$region0: #{tpu_custom_call.1}
  #allocation0 [shape = 'u32[]', space=smem, size = 0x4, offset = 0x4, fixed_abs, tag = 'smem constant byte address 0x4 - core index']
  #allocation1 [shape = 'u32[72,128]{1,0:T(1,128)}', space=vmem, size = 0x9000, scoped, tag = 'internal scratch']
  %s0 = inlined_call_operand.vmem [shape: f32[8,784], index: 0, kind: input, shape index: {}]
  %s1 = inlined_call_operand.hbm [shape: bf16[784,128], index: 1, kind: input, shape index: {}]
  %s2 = inlined_call_operand.vmem [shape: f32[1,128], index: 2, kind: input, shape index: {}]
  %s3 = inlined_call_operand.vmem [shape: bf16[128,64], index: 3, kind: input, shape index: {}]
  %s4 = inlined_call_operand.vmem [shape: f32[1,64], index: 4, kind: input, shape index: {}]
  %s5 = inlined_call_operand.vmem [shape: bf16[64,32], index: 5, kind: input, shape index: {}]
  %s6 = inlined_call_operand.vmem [shape: f32[1,32], index: 6, kind: input, shape index: {}]
  %s7 = inlined_call_operand.hbm [shape: f32[8,32], index: 7, kind: output, shape index: {}]
  %s8 = sld [smem:[#allocation0]]
  $region42: #{tpu_custom_call.1} parent=0
    _
  %s10 = ssub.s32 1, %s8
  %s11 = scalar_select 0, %s10, %s8
  $region1: #{tpu_custom_call.1} parent=0
    #allocation2 [shape = 'u8[200704]{0}', space=vmem, size = 0x31000, scoped, tag = 'input window, operand 1, single buffered']
    #allocation3 [shape = 's32[1]{0}', space=sflag, size = 0x4, scoped, tag = 'scoped memory for tpu_custom_call.1']
    #allocation4 [shape = 's32[1]{0}', space=sflag, size = 0x4, scoped, tag = 'scoped memory for tpu_custom_call.1']
    #allocation5 [shape = 'u8[4096]{0}', space=vmem, size = 0x1000, scoped, tag = 'output window, operand 0, single buffered']
    %12 = vsyncpa [#allocation3], 0
    %13 = vsyncpa [#allocation4], 0
    // Predicated region
    $region2: #{tpu_custom_call.1} parent=1 // pred_check
      _
    $region3: #{tpu_custom_call.1} parent=1 // pred_check_branch
      %15 = sbr.rel (0) target = $region5
    $region4: #{tpu_custom_call.1} parent=1 // pred_region
      _
    $region5: #{tpu_custom_call.1} parent=1 // pred_fallthru
      _
    // Predicated region
    $region6: #{tpu_custom_call.1} parent=1 // pred_check
      _
    $region7: #{tpu_custom_call.1} parent=1 // pred_check_branch
      %17 = sbr.rel (0) target = $region9
    $region8: #{tpu_custom_call.1} parent=1 // pred_region
      %19 = vsyncadd [#allocation3], 0
      %s20 = sshll.u32 %s1, 4
      %s21 = int_to_ptr.hbm [resolvable:$true] %s20
      %s22 = sshll.u32 [#allocation2], 4
      %s23 = int_to_ptr.vmem [resolvable:$true] %s22
      %28 = dma.hbm_to_vmem [thread:$0]  %s21, 6272, %s23, [#allocation3], 64, 64, 4
    $region9: #{tpu_custom_call.1} parent=1 // pred_fallthru
      _
    // Predicated region
    $region10: #{tpu_custom_call.1} parent=1 // pred_check
      _
    $region11: #{tpu_custom_call.1} parent=1 // pred_check_branch
      %30 = sbr.rel (0) target = $region13
    $region12: #{tpu_custom_call.1} parent=1 // pred_region
      _
    $region13: #{tpu_custom_call.1} parent=1 // pred_fallthru
      _
    // Predicated region
    $region14: #{tpu_custom_call.1} parent=1 // pred_check
      _
    $region15: #{tpu_custom_call.1} parent=1 // pred_check_branch
      %32 = sbr.rel (0) target = $region17
    $region16: #{tpu_custom_call.1} parent=1 // pred_region
      _
    $region17: #{tpu_custom_call.1} parent=1 // pred_fallthru
      _
    // Predicated region
    $region18: #{tpu_custom_call.1} parent=1 // pred_check
      _
    $region19: #{tpu_custom_call.1} parent=1 // pred_check_branch
      %34 = sbr.rel (0) target = $region21
    $region20: #{tpu_custom_call.1} parent=1 // pred_region
      _
    $region21: #{tpu_custom_call.1} parent=1 // pred_fallthru
      _
    // Predicated region
    $region22: #{tpu_custom_call.1} parent=1 // pred_check
      _
    $region23: #{tpu_custom_call.1} parent=1 // pred_check_branch
      %36 = sbr.rel (0) target = $region25
    $region24: #{tpu_custom_call.1} parent=1 // pred_region
      _
    $region25: #{tpu_custom_call.1} parent=1 // pred_fallthru
      _
    // Predicated region
    $region26: #{tpu_custom_call.1} parent=1 // pred_check
      _
    $region27: #{tpu_custom_call.1} parent=1 // pred_check_branch
      %38 = sbr.rel (0) target = $region29
    $region28: #{tpu_custom_call.1} parent=1 // pred_region
      _
    $region29: #{tpu_custom_call.1} parent=1 // pred_fallthru
      _
    // Predicated region
    $region30: #{tpu_custom_call.1} parent=1 // pred_check
      _
    $region31: #{tpu_custom_call.1} parent=1 // pred_check_branch
      %40 = sbr.rel (0) target = $region33
    $region32: #{tpu_custom_call.1} parent=1 // pred_region
      %42 = dma.done [#allocation3], 6272
    $region33: #{tpu_custom_call.1} parent=1 // pred_fallthru
      _
    %v44 = vld [vmem:[%s0] sm:$0xff]
    %v45 = vld [vmem:[%s0 + $0x8] sm:$0xff]
    %v46 = vld [vmem:[%s0 + $0x10] sm:$0xff]
    %v47 = vld [vmem:[%s0 + $0x18] sm:$0xff]
    %v48 = vld [vmem:[%s0 + $0x20] sm:$0xff]
    %v49 = vld [vmem:[%s0 + $0x28] sm:$0xff]
    %v50 = vld [vmem:[%s0 + $0x30] sm:$0xff]
    %v51 = vpack.c.bf16 %v44, %v44
    %v52 = vpack.c.bf16 %v45, %v45
    %v53 = vpack.c.bf16 %v46, %v46
    %v54 = vpack.c.bf16 %v47, %v47
    %v55 = vpack.c.bf16 %v48, %v48
    %v56 = vpack.c.bf16 %v49, %v49
    %v57 = vpack.c.bf16 %v50, %v50
    %v58 = vld [vmem:[#allocation2] sm:$0xf]
    %v59 = vld [vmem:[#allocation2 + $0x4] sm:$0xf]
    %v60 = vld [vmem:[#allocation2 + $0x8] sm:$0xf]
    %v61 = vld [vmem:[#allocation2 + $0xc] sm:$0xf]
    %v62 = vld [vmem:[#allocation2 + $0x10] sm:$0xf]
    %v63 = vld [vmem:[#allocation2 + $0x14] sm:$0xf]
    %v64 = vld [vmem:[#allocation2 + $0x18] sm:$0xf]
    %v65 = vld [vmem:[#allocation2 + $0x1c] sm:$0xf]
    %v66 = vld [vmem:[#allocation2 + $0x20] sm:$0xf]
    %v67 = vld [vmem:[#allocation2 + $0x24] sm:$0xf]
    %v68 = vld [vmem:[#allocation2 + $0x28] sm:$0xf]
    %v69 = vld [vmem:[#allocation2 + $0x2c] sm:$0xf]
    %v70 = vld [vmem:[#allocation2 + $0x30] sm:$0xf]
    %v71 = vld [vmem:[#allocation2 + $0x34] sm:$0xf]
    %v72 = vld [vmem:[#allocation2 + $0x38] sm:$0xf]
    %v73 = vld [vmem:[#allocation2 + $0x3c] sm:$0xf]
    %v74 = vld [vmem:[#allocation2 + $0x40] sm:$0xf]
    %v75 = vld [vmem:[#allocation2 + $0x44] sm:$0xf]
    %v76 = vld [vmem:[#allocation2 + $0x48] sm:$0xf]
    %v77 = vld [vmem:[#allocation2 + $0x4c] sm:$0xf]
    %v78 = vld [vmem:[#allocation2 + $0x50] sm:$0xf]
    %v79 = vld [vmem:[#allocation2 + $0x54] sm:$0xf]
    %v80 = vld [vmem:[#allocation2 + $0x58] sm:$0xf]
    %v81 = vld [vmem:[#allocation2 + $0x5c] sm:$0xf]
    %v82 = vld [vmem:[#allocation2 + $0x60] sm:$0xf]
    %v83 = vld [vmem:[#allocation2 + $0x64] sm:$0xf]
    %v84 = vld [vmem:[#allocation2 + $0x68] sm:$0xf]
    %v85 = vld [vmem:[#allocation2 + $0x6c] sm:$0xf]
    %v86 = vld [vmem:[#allocation2 + $0x70] sm:$0xf]
    %v87 = vld [vmem:[#allocation2 + $0x74] sm:$0xf]
    %v88 = vld [vmem:[#allocation2 + $0x78] sm:$0xf]
    %v89 = vld [vmem:[#allocation2 + $0x7c] sm:$0xf]
    %v90 = vld [vmem:[#allocation2 + $0x80] sm:$0xf]
    %v91 = vld [vmem:[#allocation2 + $0x84] sm:$0xf]
    %v92 = vld [vmem:[#allocation2 + $0x88] sm:$0xf]
    %v93 = vld [vmem:[#allocation2 + $0x8c] sm:$0xf]
    %v94 = vld [vmem:[#allocation2 + $0x90] sm:$0xf]
    %v95 = vld [vmem:[#allocation2 + $0x94] sm:$0xf]
    %v96 = vld [vmem:[#allocation2 + $0x98] sm:$0xf]
    %v97 = vld [vmem:[#allocation2 + $0x9c] sm:$0xf]
    %v98 = vld [vmem:[#allocation2 + $0xa0] sm:$0xf]
    %v99 = vld [vmem:[#allocation2 + $0xa4] sm:$0xf]
    %v100 = vld [vmem:[#allocation2 + $0xa8] sm:$0xf]
    %v101 = vld [vmem:[#allocation2 + $0xac] sm:$0xf]
    %v102 = vld [vmem:[#allocation2 + $0xb0] sm:$0xf]
    %v103 = vld [vmem:[#allocation2 + $0xb4] sm:$0xf]
    %v104 = vld [vmem:[#allocation2 + $0xb8] sm:$0xf]
    %v105 = vld [vmem:[#allocation2 + $0xbc] sm:$0xf]
    %v106 = vld [vmem:[#allocation2 + $0xc0] sm:$0xf]
    %v107 = vld [vmem:[#allocation2 + $0xc4] sm:$0xf]
    %v108 = vld [vmem:[#allocation2 + $0xc8] sm:$0xf]
    %v109 = vld [vmem:[#allocation2 + $0xcc] sm:$0xf]
    %v110 = vld [vmem:[#allocation2 + $0xd0] sm:$0xf]
    %v111 = vld [vmem:[#allocation2 + $0xd4] sm:$0xf]
    %v112 = vld [vmem:[#allocation2 + $0xd8] sm:$0xf]
    %v113 = vld [vmem:[#allocation2 + $0xdc] sm:$0xf]
    %v114 = vld [vmem:[#allocation2 + $0xe0] sm:$0xf]
    %v115 = vld [vmem:[#allocation2 + $0xe4] sm:$0xf]
    %v116 = vld [vmem:[#allocation2 + $0xe8] sm:$0xf]
    %v117 = vld [vmem:[#allocation2 + $0xec] sm:$0xf]
    %v118 = vld [vmem:[#allocation2 + $0xf0] sm:$0xf]
    %v119 = vld [vmem:[#allocation2 + $0xf4] sm:$0xf]
    %v120 = vld [vmem:[#allocation2 + $0xf8] sm:$0xf]
    %v121 = vld [vmem:[#allocation2 + $0xfc] sm:$0xf]
    %v122 = vld [vmem:[#allocation2 + $0x100] sm:$0xf]
    %v123 = vld [vmem:[#allocation2 + $0x104] sm:$0xf]
    %v124 = vld [vmem:[#allocation2 + $0x108] sm:$0xf]
    %v125 = vld [vmem:[#allocation2 + $0x10c] sm:$0xf]
    %v126 = vld [vmem:[#allocation2 + $0x110] sm:$0xf]
    %v127 = vld [vmem:[#allocation2 + $0x114] sm:$0xf]
    %v128 = vld [vmem:[#allocation2 + $0x118] sm:$0xf]
    %v129 = vld [vmem:[#allocation2 + $0x11c] sm:$0xf]
    %v130 = vld [vmem:[#allocation2 + $0x120] sm:$0xf]
    %v131 = vld [vmem:[#allocation2 + $0x124] sm:$0xf]
    %v132 = vld [vmem:[#allocation2 + $0x128] sm:$0xf]
    %v133 = vld [vmem:[#allocation2 + $0x12c] sm:$0xf]
    %v134 = vld [vmem:[#allocation2 + $0x130] sm:$0xf]
    %v135 = vld [vmem:[#allocation2 + $0x134] sm:$0xf]
    %v136 = vld [vmem:[#allocation2 + $0x138] sm:$0xf]
    %v137 = vld [vmem:[#allocation2 + $0x13c] sm:$0xf]
    %v138 = vld [vmem:[#allocation2 + $0x140] sm:$0xf]
    %v139 = vld [vmem:[#allocation2 + $0x144] sm:$0xf]
    %v140 = vld [vmem:[#allocation2 + $0x148] sm:$0xf]
    %v141 = vld [vmem:[#allocation2 + $0x14c] sm:$0xf]
    %v142 = vld [vmem:[#allocation2 + $0x150] sm:$0xf]
    %v143 = vld [vmem:[#allocation2 + $0x154] sm:$0xf]
    %v144 = vld [vmem:[#allocation2 + $0x158] sm:$0xf]
    %v145 = vld [vmem:[#allocation2 + $0x15c] sm:$0xf]
    %v146 = vld [vmem:[#allocation2 + $0x160] sm:$0xf]
    %v147 = vld [vmem:[#allocation2 + $0x164] sm:$0xf]
    %v148 = vld [vmem:[#allocation2 + $0x168] sm:$0xf]
    %v149 = vld [vmem:[#allocation2 + $0x16c] sm:$0xf]
    %v150 = vld [vmem:[#allocation2 + $0x170] sm:$0xf]
    %v151 = vld [vmem:[#allocation2 + $0x174] sm:$0xf]
    %v152 = vld [vmem:[#allocation2 + $0x178] sm:$0xf]
    %v153 = vld [vmem:[#allocation2 + $0x17c] sm:$0xf]
    %v154 = vld [vmem:[#allocation2 + $0x180] sm:$0xf]
    %v155 = vld [vmem:[#allocation2 + $0x184] sm:$0xf]
    %v156 = vld [vmem:[%s2] sm:$0x1]
    %v158 = vperm.slane %v156, 0
    %v258 = vunpack.c.l.b16 %v58
    %v259 = vunpack.c.l.b16 %v59
    %v260 = vunpack.c.l.b16 %v60
    %v261 = vunpack.c.l.b16 %v61
    %v262 = vunpack.c.l.b16 %v62
    %v263 = vunpack.c.l.b16 %v63
    %v264 = vunpack.c.l.b16 %v64
    %v265 = vunpack.c.l.b16 %v65
    %v266 = vunpack.c.l.b16 %v66
    %v267 = vunpack.c.l.b16 %v67
    %v268 = vunpack.c.l.b16 %v68
    %v269 = vunpack.c.l.b16 %v69
    %v270 = vunpack.c.l.b16 %v70
    %v271 = vunpack.c.l.b16 %v71
    %v272 = vunpack.c.l.b16 %v72
    %v273 = vunpack.c.l.b16 %v73
    %v274 = vunpack.c.l.b16 %v74
    %v275 = vunpack.c.l.b16 %v75
    %v276 = vunpack.c.l.b16 %v76
    %v277 = vunpack.c.l.b16 %v77
    %v278 = vunpack.c.l.b16 %v78
    %v279 = vunpack.c.l.b16 %v79
    %v280 = vunpack.c.l.b16 %v80
    %v281 = vunpack.c.l.b16 %v81
    %v282 = vunpack.c.l.b16 %v82
    %v283 = vunpack.c.l.b16 %v83
    %v284 = vunpack.c.l.b16 %v84
    %v285 = vunpack.c.l.b16 %v85
    %v286 = vunpack.c.l.b16 %v86
    %v287 = vunpack.c.l.b16 %v87
    %v288 = vunpack.c.l.b16 %v88
    %v289 = vunpack.c.l.b16 %v89
    %v290 = vunpack.c.l.b16 %v90
    %v291 = vunpack.c.l.b16 %v91
    %v292 = vunpack.c.l.b16 %v92
    %v293 = vunpack.c.l.b16 %v93
    %v294 = vunpack.c.l.b16 %v94
    %v295 = vunpack.c.l.b16 %v95
    %v296 = vunpack.c.l.b16 %v96
    %v297 = vunpack.c.l.b16 %v97
    %v298 = vunpack.c.l.b16 %v98
    %v299 = vunpack.c.l.b16 %v99
    %v300 = vunpack.c.l.b16 %v100
    %v301 = vunpack.c.l.b16 %v101
    %v302 = vunpack.c.l.b16 %v102
    %v303 = vunpack.c.l.b16 %v103
    %v304 = vunpack.c.l.b16 %v104
    %v305 = vunpack.c.l.b16 %v105
    %v306 = vunpack.c.l.b16 %v106
    %v307 = vunpack.c.l.b16 %v107
    %v308 = vunpack.c.l.b16 %v108
    %v309 = vunpack.c.l.b16 %v109
    %v310 = vunpack.c.l.b16 %v110
    %v311 = vunpack.c.l.b16 %v111
    %v312 = vunpack.c.l.b16 %v112
    %v313 = vunpack.c.l.b16 %v113
    %v314 = vunpack.c.l.b16 %v114
    %v315 = vunpack.c.l.b16 %v115
    %v316 = vunpack.c.l.b16 %v116
    %v317 = vunpack.c.l.b16 %v117
    %v318 = vunpack.c.l.b16 %v118
    %v319 = vunpack.c.l.b16 %v119
    %v320 = vunpack.c.l.b16 %v120
    %v321 = vunpack.c.l.b16 %v121
    %v322 = vunpack.c.l.b16 %v122
    %v323 = vunpack.c.l.b16 %v123
    %v324 = vunpack.c.l.b16 %v124
    %v325 = vunpack.c.l.b16 %v125
    %v326 = vunpack.c.l.b16 %v126
    %v327 = vunpack.c.l.b16 %v127
    %v328 = vunpack.c.l.b16 %v128
    %v329 = vunpack.c.l.b16 %v129
    %v330 = vunpack.c.l.b16 %v130
    %v331 = vunpack.c.l.b16 %v131
    %v332 = vunpack.c.l.b16 %v132
    %v333 = vunpack.c.l.b16 %v133
    %v334 = vunpack.c.l.b16 %v134
    %v335 = vunpack.c.l.b16 %v135
    %v336 = vunpack.c.l.b16 %v136
    %v337 = vunpack.c.l.b16 %v137
    %v338 = vunpack.c.l.b16 %v138
    %v339 = vunpack.c.l.b16 %v139
    %v340 = vunpack.c.l.b16 %v140
    %v341 = vunpack.c.l.b16 %v141
    %v342 = vunpack.c.l.b16 %v142
    %v343 = vunpack.c.l.b16 %v143
    %v344 = vunpack.c.l.b16 %v144
    %v345 = vunpack.c.l.b16 %v145
    %v346 = vunpack.c.l.b16 %v146
    %v347 = vunpack.c.l.b16 %v147
    %v348 = vunpack.c.l.b16 %v148
    %v349 = vunpack.c.l.b16 %v149
    %v350 = vunpack.c.l.b16 %v150
    %v351 = vunpack.c.l.b16 %v151
    %v352 = vunpack.c.l.b16 %v152
    %v353 = vunpack.c.l.b16 %v153
    %v354 = vunpack.c.l.b16 %v154
    %v355 = vunpack.c.l.b16 %v155
    %v356 = vpack.c.b16 %v259, %v258
    %v357 = vpack.c.b16 %v261, %v260
    %v358 = vpack.c.b16 %v263, %v262
    %v359 = vpack.c.b16 %v265, %v264
    %v360 = vpack.c.b16 %v267, %v266
    %v361 = vpack.c.b16 %v269, %v268
    %v362 = vpack.c.b16 %v271, %v270
    %v363 = vpack.c.b16 %v273, %v272
    %v364 = vpack.c.b16 %v275, %v274
    %v365 = vpack.c.b16 %v277, %v276
    %v366 = vpack.c.b16 %v279, %v278
    %v367 = vpack.c.b16 %v281, %v280
    %v368 = vpack.c.b16 %v283, %v282
    %v369 = vpack.c.b16 %v285, %v284
    %v370 = vpack.c.b16 %v287, %v286
    %v371 = vpack.c.b16 %v289, %v288
    %v372 = vpack.c.b16 %v291, %v290
    %v373 = vpack.c.b16 %v293, %v292
    %v374 = vpack.c.b16 %v295, %v294
    %v375 = vpack.c.b16 %v297, %v296
    %v376 = vpack.c.b16 %v299, %v298
    %v377 = vpack.c.b16 %v301, %v300
    %v378 = vpack.c.b16 %v303, %v302
    %v379 = vpack.c.b16 %v305, %v304
    %v380 = vpack.c.b16 %v307, %v306
    %v381 = vpack.c.b16 %v309, %v308
    %v382 = vpack.c.b16 %v311, %v310
    %v383 = vpack.c.b16 %v313, %v312
    %v384 = vpack.c.b16 %v315, %v314
    %v385 = vpack.c.b16 %v317, %v316
    %v386 = vpack.c.b16 %v319, %v318
    %v387 = vpack.c.b16 %v321, %v320
    %v388 = vpack.c.b16 %v323, %v322
    %v389 = vpack.c.b16 %v325, %v324
    %v390 = vpack.c.b16 %v327, %v326
    %v391 = vpack.c.b16 %v329, %v328
    %v392 = vpack.c.b16 %v331, %v330
    %v393 = vpack.c.b16 %v333, %v332
    %v394 = vpack.c.b16 %v335, %v334
    %v395 = vpack.c.b16 %v337, %v336
    %v396 = vpack.c.b16 %v339, %v338
    %v397 = vpack.c.b16 %v341, %v340
    %v398 = vpack.c.b16 %v343, %v342
    %v399 = vpack.c.b16 %v345, %v344
    %v400 = vpack.c.b16 %v347, %v346
    %v401 = vpack.c.b16 %v349, %v348
    %v402 = vpack.c.b16 %v351, %v350
    %v403 = vpack.c.b16 %v353, %v352
    %v404 = vpack.c.b16 %v355, %v354
    %vm454 = vcmask 130048
    %v456 = vsel %vm454, %v57, 0
    %458 = vmatpush.bf16.msra.mxu0 %v363
    %459 = vmatpush.bf16.msra.mxu0 %v362
    %460 = vmatpush.bf16.msra.mxu0 %v361
    %461 = vmatpush.bf16.msra.mxu0 %v360
    %462 = vmatpush.bf16.msra.mxu0 %v359
    %463 = vmatpush.bf16.msra.mxu0 %v358
    %464 = vmatpush.bf16.msra.mxu0 %v357
    %465 = vmatpush.bf16.msra.mxu0 %v356
    %466 = vmatmul.bf16.gmra.mxu0 %v51
    %v467 = vpop.f32.mrf.mxu0
    %v468 = vadd.f32 %v158, %v467
    %v469 = vpop.f32.mrf.mxu0
    %470 = vdwg.mxu0
    %471 = vmatpush.bf16.msra.mxu0 %v371
    %472 = vmatpush.bf16.msra.mxu0 %v370
    %473 = vmatpush.bf16.msra.mxu0 %v369
    %474 = vmatpush.bf16.msra.mxu0 %v368
    %475 = vmatpush.bf16.msra.mxu0 %v367
    %476 = vmatpush.bf16.msra.mxu0 %v366
    %477 = vmatpush.bf16.msra.mxu0 %v365
    %478 = vmatpush.bf16.msra.mxu0 %v364
    %479 = vmatmul.bf16.gmra.mxu0 %v52
    %v480 = vpop.f32.mrf.mxu0
    %v481 = vadd.f32 %v468, %v480
    %v482 = vpop.f32.mrf.mxu0
    %483 = vdwg.mxu0
    %484 = vmatpush.bf16.msra.mxu0 %v379
    %485 = vmatpush.bf16.msra.mxu0 %v378
    %486 = vmatpush.bf16.msra.mxu0 %v377
    %487 = vmatpush.bf16.msra.mxu0 %v376
    %488 = vmatpush.bf16.msra.mxu0 %v375
    %489 = vmatpush.bf16.msra.mxu0 %v374
    %490 = vmatpush.bf16.msra.mxu0 %v373
    %491 = vmatpush.bf16.msra.mxu0 %v372
    %492 = vmatmul.bf16.gmra.mxu0 %v53
    %v493 = vpop.f32.mrf.mxu0
    %v494 = vadd.f32 %v481, %v493
    %v495 = vpop.f32.mrf.mxu0
    %496 = vdwg.mxu0
    %497 = vmatpush.bf16.msra.mxu0 %v387
    %498 = vmatpush.bf16.msra.mxu0 %v386
    %499 = vmatpush.bf16.msra.mxu0 %v385
    %500 = vmatpush.bf16.msra.mxu0 %v384
    %501 = vmatpush.bf16.msra.mxu0 %v383
    %502 = vmatpush.bf16.msra.mxu0 %v382
    %503 = vmatpush.bf16.msra.mxu0 %v381
    %504 = vmatpush.bf16.msra.mxu0 %v380
    %505 = vmatmul.bf16.gmra.mxu0 %v54
    %v506 = vpop.f32.mrf.mxu0
    %v507 = vadd.f32 %v494, %v506
    %v508 = vpop.f32.mrf.mxu0
    %509 = vdwg.mxu0
    %510 = vmatpush.bf16.msra.mxu0 %v395
    %511 = vmatpush.bf16.msra.mxu0 %v394
    %512 = vmatpush.bf16.msra.mxu0 %v393
    %513 = vmatpush.bf16.msra.mxu0 %v392
    %514 = vmatpush.bf16.msra.mxu0 %v391
    %515 = vmatpush.bf16.msra.mxu0 %v390
    %516 = vmatpush.bf16.msra.mxu0 %v389
    %517 = vmatpush.bf16.msra.mxu0 %v388
    %518 = vmatmul.bf16.gmra.mxu0 %v55
    %v519 = vpop.f32.mrf.mxu0
    %v520 = vadd.f32 %v507, %v519
    %v521 = vpop.f32.mrf.mxu0
    %522 = vdwg.mxu0
    %523 = vmatpush.bf16.msra.mxu0 %v403
    %524 = vmatpush.bf16.msra.mxu0 %v402
    %525 = vmatpush.bf16.msra.mxu0 %v401
    %526 = vmatpush.bf16.msra.mxu0 %v400
    %527 = vmatpush.bf16.msra.mxu0 %v399
    %528 = vmatpush.bf16.msra.mxu0 %v398
    %529 = vmatpush.bf16.msra.mxu0 %v397
    %530 = vmatpush.bf16.msra.mxu0 %v396
    %531 = vmatmul.bf16.gmra.mxu0 %v56
    %v532 = vpop.f32.mrf.mxu0
    %v533 = vadd.f32 %v520, %v532
    %v534 = vpop.f32.mrf.mxu0
    %535 = vdwg.mxu0
    %536 = vmatpush.bf16.msra.mxu0 0
    %537 = vmatpush.bf16.msra.mxu0 0
    %538 = vmatpush.bf16.msra.mxu0 0
    %539 = vmatpush.bf16.msra.mxu0 0
    %540 = vmatpush.bf16.msra.mxu0 0
    %541 = vmatpush.bf16.msra.mxu0 0
    %542 = vmatpush.bf16.msra.mxu0 0
    %543 = vmatpush.bf16.msra.mxu0 %v404
    %544 = vmatmul.bf16.gmra.mxu0 %v456
    %v545 = vpop.f32.mrf.mxu0
    %v546 = vadd.f32 %v533, %v545
    %v547 = vpop.f32.mrf.mxu0
    %548 = vdwg.mxu0
    %v549 = vmax.f32 %v546, 0.0
    %v550 = vpack.c.bf16 %v549, %v549
    %v551 = vld [vmem:[%s3] sm:$0xf]
    %v552 = vld [vmem:[%s3 + $0x4] sm:$0xf]
    %v553 = vld [vmem:[%s3 + $0x8] sm:$0xf]
    %v554 = vld [vmem:[%s3 + $0xc] sm:$0xf]
    %v555 = vld [vmem:[%s3 + $0x10] sm:$0xf]
    %v556 = vld [vmem:[%s3 + $0x14] sm:$0xf]
    %v557 = vld [vmem:[%s3 + $0x18] sm:$0xf]
    %v558 = vld [vmem:[%s3 + $0x1c] sm:$0xf]
    %v559 = vld [vmem:[%s3 + $0x20] sm:$0xf]
    %v560 = vld [vmem:[%s3 + $0x24] sm:$0xf]
    %v561 = vld [vmem:[%s3 + $0x28] sm:$0xf]
    %v562 = vld [vmem:[%s3 + $0x2c] sm:$0xf]
    %v563 = vld [vmem:[%s3 + $0x30] sm:$0xf]
    %v564 = vld [vmem:[%s3 + $0x34] sm:$0xf]
    %v565 = vld [vmem:[%s3 + $0x38] sm:$0xf]
    %v566 = vld [vmem:[%s3 + $0x3c] sm:$0xf]
    %v567 = vld [vmem:[%s4] sm:$0x1]
    %v569 = vperm.slane %v567, 0
    %v587 = vunpack.c.l.b16 %v551
    %v588 = vunpack.c.l.b16 %v552
    %v589 = vunpack.c.l.b16 %v553
    %v590 = vunpack.c.l.b16 %v554
    %v591 = vunpack.c.l.b16 %v555
    %v592 = vunpack.c.l.b16 %v556
    %v593 = vunpack.c.l.b16 %v557
    %v594 = vunpack.c.l.b16 %v558
    %v595 = vunpack.c.l.b16 %v559
    %v596 = vunpack.c.l.b16 %v560
    %v597 = vunpack.c.l.b16 %v561
    %v598 = vunpack.c.l.b16 %v562
    %v599 = vunpack.c.l.b16 %v563
    %v600 = vunpack.c.l.b16 %v564
    %v601 = vunpack.c.l.b16 %v565
    %v602 = vunpack.c.l.b16 %v566
    %v603 = vpack.c.b16 %v588, %v587
    %v604 = vpack.c.b16 %v590, %v589
    %v605 = vpack.c.b16 %v592, %v591
    %v606 = vpack.c.b16 %v594, %v593
    %v607 = vpack.c.b16 %v596, %v595
    %v608 = vpack.c.b16 %v598, %v597
    %v609 = vpack.c.b16 %v600, %v599
    %v610 = vpack.c.b16 %v602, %v601
    %619 = vmatpush.bf16.msra.mxu0 %v610
    %620 = vmatpush.bf16.msra.mxu0 %v609
    %621 = vmatpush.bf16.msra.mxu0 %v608
    %622 = vmatpush.bf16.msra.mxu0 %v607
    %623 = vmatpush.bf16.msra.mxu0 %v606
    %624 = vmatpush.bf16.msra.mxu0 %v605
    %625 = vmatpush.bf16.msra.mxu0 %v604
    %626 = vmatpush.bf16.msra.mxu0 %v603
    %627 = vmatmul.bf16.gmra.mxu0 %v550
    %v628 = vpop.f32.mrf.mxu0
    %v629 = vadd.f32 %v569, %v628
    %v630 = vpop.f32.mrf.mxu0
    %631 = vdwg.mxu0
    %v632 = vmax.f32 %v629, 0.0
    %v633 = vpack.c.bf16 %v632, %v632
    %v634 = vld [vmem:[%s5] sm:$0xf]
    %v635 = vld [vmem:[%s5 + $0x4] sm:$0xf]
    %v636 = vld [vmem:[%s5 + $0x8] sm:$0xf]
    %v637 = vld [vmem:[%s5 + $0xc] sm:$0xf]
    %v638 = vld [vmem:[%s5 + $0x10] sm:$0xf]
    %v639 = vld [vmem:[%s5 + $0x14] sm:$0xf]
    %v640 = vld [vmem:[%s5 + $0x18] sm:$0xf]
    %v641 = vld [vmem:[%s5 + $0x1c] sm:$0xf]
    %v642 = vld [vmem:[%s6] sm:$0x1]
    %v644 = vperm.slane %v642, 0
    %v654 = vunpack.c.l.b16 %v634
    %v655 = vunpack.c.l.b16 %v635
    %v656 = vunpack.c.l.b16 %v636
    %v657 = vunpack.c.l.b16 %v637
    %v658 = vunpack.c.l.b16 %v638
    %v659 = vunpack.c.l.b16 %v639
    %v660 = vunpack.c.l.b16 %v640
    %v661 = vunpack.c.l.b16 %v641
    %v662 = vpack.c.b16 %v655, %v654
    %v663 = vpack.c.b16 %v657, %v656
    %v664 = vpack.c.b16 %v659, %v658
    %v665 = vpack.c.b16 %v661, %v660
    %vm670 = vcmask 523264
    %v672 = vsel %vm670, %v633, 0
    %674 = vmatpush.bf16.msra.mxu0 0
    %675 = vmatpush.bf16.msra.mxu0 0
    %676 = vmatpush.bf16.msra.mxu0 0
    %677 = vmatpush.bf16.msra.mxu0 0
    %678 = vmatpush.bf16.msra.mxu0 %v665
    %679 = vmatpush.bf16.msra.mxu0 %v664
    %680 = vmatpush.bf16.msra.mxu0 %v663
    %681 = vmatpush.bf16.msra.mxu0 %v662
    %682 = vmatmul.bf16.gmra.mxu0 %v672
    %v683 = vpop.f32.mrf.mxu0
    %v684 = vadd.f32 %v644, %v683
    %v685 = vpop.f32.mrf.mxu0
    %686 = vdwg.mxu0
    %vm687 = vcmask 261120
    %688 = vst.msk [vmem:[#allocation5] sm:$0xff] %vm687, %v684
    // Predicated region
    $region34: #{tpu_custom_call.1} parent=1 // pred_check
      _
    $region35: #{tpu_custom_call.1} parent=1 // pred_check_branch
      %690 = sbr.rel (0) target = $region37
    $region36: #{tpu_custom_call.1} parent=1 // pred_region
      %692 = vsyncadd [#allocation4], 0
      %s694 = sshll.u32 [#allocation5], 4
      %s695 = int_to_ptr.vmem [resolvable:$true] %s694
      %s696 = sshll.u32 %s7, 4
      %s697 = int_to_ptr.hbm [resolvable:$true] %s696
      %699 = dma.vmem_to_hbm [thread:$0]  %s695, 128, %s697, [#allocation4]
    $region37: #{tpu_custom_call.1} parent=1 // pred_fallthru
      _
    // Predicated region
    $region38: #{tpu_custom_call.1} parent=1 // pred_check
      _
    $region39: #{tpu_custom_call.1} parent=1 // pred_check_branch
      %701 = sbr.rel (0) target = $region41
    $region40: #{tpu_custom_call.1} parent=1 // pred_region
      %703 = dma.done [#allocation4], 128
    $region41: #{tpu_custom_call.1} parent=1 // pred_fallthru
      _
    %704 = vsyncpa [#allocation3], 1
    %705 = vsyncpa [#allocation4], 1

</llo_original>
